<compile_context>
chip_gen: v7x
topology: tpu7x:2x2x1
jax: 0.10.0
libtpu: 0.0.40
codegen_flags: <defaults>
</compile_context>

<pallas_src>
import functools

import jax
import jax.numpy as jnp
from jax.experimental import pallas as pl
from jax.experimental.pallas import tpu as pltpu


def _round_up(v, m):
    return ((v + m - 1) // m) * m


def _agnn_kernel(counts_ref, q_ref, kn_ref, xs_ref, adj_ref, out_ref, acc_ref,
                 *, mxu_dtype):
    # counts_ref: SMEM [grid_i, grid_k] int32 — edges per tile (scalar prefetch).
    # q_ref : [TM, Fp] mxu_dtype   col 0 = -|beta|, cols 1..F = beta * x_i / ||x_i||
    # kn_ref: [TN, Fp] mxu_dtype   col 0 = 1,       cols 1..F = x_j / ||x_j||
    # xs_ref: [TN, Fp] mxu_dtype   col 0 = 1,       cols 1..F = x_j
    # adj_ref:[TM, TN] int8        1 iff edge (i <- j)
    # out_ref:[TM, Fp]             col 0 junk, cols 1..F = output features
    # acc_ref:[TM, Fp] f32 scratch col 0 accumulates the softmax denominator l.
    i = pl.program_id(0)
    k = pl.program_id(1)

    @pl.when(k == 0)
    def _init():
        acc_ref[...] = jnp.zeros_like(acc_ref)

    # Tiles without any edge contribute exactly zero: skip both matmuls and the exp.
    @pl.when(counts_ref[i, k] > 0)
    def _accumulate():
        # s = beta*cos(i,j) - |beta|  (shift rides in column 0 of q/kn), so s <= 0 and
        # exp never overflows; the constant shift cancels in acc/l at finalize.
        s = jax.lax.dot_general(q_ref[...], kn_ref[...], (((1,), (1,)), ((), ())),
                                preferred_element_type=jnp.float32)      # [TM, TN]
        p = (jnp.exp(s) * adj_ref[...].astype(jnp.float32)).astype(mxu_dtype)
        # One MXU op yields both the weighted feature sum (cols 1..F) and the softmax
        # denominator l = sum_j p_ij (col 0, via the ones column of xs).
        acc_ref[...] += jnp.dot(p, xs_ref[...], preferred_element_type=jnp.float32)

    @pl.when(k == pl.num_programs(1) - 1)
    def _finalize():
        acc = acc_ref[...]
        l = acc[:, 0:1]                              # softmax denominator per target row
        valid = l > 0.0                              # rows with at least one incident edge
        inv_l = pl.reciprocal(l, approx=True)        # EUP slot
        inv_l = inv_l * (2.0 - l * inv_l)            # one Newton step -> ~f32 accuracy
        out_ref[...] = jnp.where(valid, acc * inv_l, 0.0).astype(out_ref.dtype)


def agnn_forward(x, edge_index, beta, *, tile_m=256, tile_n=1024,
                 mxu_dtype=jnp.bfloat16):
    """AGNN propagation.

    x: [N, F] float, edge_index: [2, E] int32 (row = target i, col = source j),
    beta: scalar.  Returns [N, F] in x.dtype.  mxu_dtype=bf16 (default) runs both
    matmuls at full MXU rate with f32 accumulation; pass jnp.float32 for f32 operands.
    """
    n, f = x.shape
    assert tile_m % 32 == 0 and tile_n % 128 == 0

    # Lane-dense feature padding; column 0 is reserved for shift / ones / denominator.
    f_pad = _round_up(f + 1, 128)

    # Clamp tiles to the padded problem (tiny graphs -> (1,1) grid) and pad rows and
    # columns independently (no lcm blow-up).
    tile_m = min(tile_m, _round_up(n, 32))
    tile_n = min(tile_n, _round_up(n, 128))
    n_rows = _round_up(n, tile_m)
    n_cols = _round_up(n, tile_n)
    grid = (n_rows // tile_m, n_cols // tile_n)

    x32 = x.astype(jnp.float32)
    # Row-wise inverse L2 norm, computed ONCE (torch F.normalize semantics):
    # rsqrt(max(sumsq, 1e-24)) == 1 / max(||x||, 1e-12).
    sumsq = jnp.sum(x32 * x32, axis=-1, keepdims=True)
    xn = x32 * jax.lax.rsqrt(jnp.maximum(sumsq, jnp.float32(1e-24)))

    beta_f = jnp.asarray(beta, jnp.float32).reshape(())
    abs_beta = jnp.abs(beta_f)

    # Pre-normalized, pre-scaled, pre-cast MXU operands (hoisted out of the k loop).
    q = jnp.zeros((n_rows, f_pad), jnp.float32)
    q = q.at[:n, 1:f + 1].set(beta_f * xn)
    q = q.at[:n, 0].set(-abs_beta)                 # constant softmax shift column
    q = q.astype(mxu_dtype)

    kn = jnp.zeros((n_cols, f_pad), jnp.float32)
    kn = kn.at[:n, 1:f + 1].set(xn)
    kn = kn.at[:n, 0].set(1.0)                     # partner of the shift column
    kn = kn.astype(mxu_dtype)

    xs = jnp.zeros((n_cols, f_pad), jnp.float32)
    xs = xs.at[:n, 1:f + 1].set(x32)
    xs = xs.at[:n, 0].set(1.0)                     # ones column -> softmax denominator
    xs = xs.astype(mxu_dtype)

    # Dense int8 adjacency mask adj[i, j] = 1 iff edge (i <- j).
    # TODO(synk): bit-pack (1 bit/edge) or CSR + scalar-prefetched tile edge lists for
    # large sparse graphs; the dense O(N^2) build here is the real scale limit.
    row, col = edge_index[0], edge_index[1]
    adj = jnp.zeros((n_rows, n_cols), jnp.int8).at[row, col].set(1)

    # Per-tile edge counts (scalar-prefetched to SMEM) so empty tiles skip all compute.
    counts = adj.reshape(grid[0], tile_m, grid[1], tile_n).sum(
        axis=(1, 3), dtype=jnp.int32)

    # Explicit VMEM budget: double-buffered inputs/output + resident f32 accumulator,
    # with generous headroom (>= 32 MiB so large tiles never trip v5e's 16 MiB default,
    # capped at 64 MiB for v7x).
    mxu_b = jnp.dtype(mxu_dtype).itemsize
    out_b = x.dtype.itemsize
    est = (2 * (tile_m * f_pad * mxu_b            # q block
                + 2 * tile_n * f_pad * mxu_b      # kn + xs blocks
                + tile_m * tile_n                 # int8 adjacency block
                + tile_m * f_pad * out_b)         # output block
           + tile_m * f_pad * 4)                  # accumulator scratch
    vmem_limit = int(min(64 * 2**20, max(32 * 2**20, 2 * est)))

    out_p = pl.pallas_call(
        functools.partial(_agnn_kernel, mxu_dtype=mxu_dtype),
        out_shape=jax.ShapeDtypeStruct((n_rows, f_pad), x.dtype),
        grid_spec=pltpu.PrefetchScalarGridSpec(
            num_scalar_prefetch=1,
            grid=grid,
            in_specs=[
                pl.BlockSpec((tile_m, f_pad), lambda i, k, c: (i, 0)),    # q (targets)
                pl.BlockSpec((tile_n, f_pad), lambda i, k, c: (k, 0)),    # normalized src
                pl.BlockSpec((tile_n, f_pad), lambda i, k, c: (k, 0)),    # raw src (+ones)
                pl.BlockSpec((tile_m, tile_n), lambda i, k, c: (i, k)),   # int8 adjacency
            ],
            out_specs=pl.BlockSpec((tile_m, f_pad), lambda i, k, c: (i, 0)),
            scratch_shapes=[pltpu.VMEM((tile_m, f_pad), jnp.float32)],
        ),
        compiler_params=pltpu.CompilerParams(
            dimension_semantics=("parallel", "arbitrary"),
            vmem_limit_bytes=vmem_limit),
    )(counts, q, kn, xs, adj)

    # Column 0 carried the denominator; features live in columns 1..F.
    return out_p[:n, 1:f + 1]


def agnn_reference(x, edge_index, beta):
    """Pure-JAX reference mirroring the PyTorch AGNN forward (for verification)."""
    n = x.shape[0]
    row, col = edge_index[0], edge_index[1]
    adj = jnp.zeros((n, n), jnp.float32).at[row, col].set(1.0)
    xn = x / jnp.maximum(jnp.linalg.norm(x, axis=-1, keepdims=True), 1e-12)
    cos = xn @ xn.T
    logits = jnp.where(adj > 0, beta * cos, -1e30)
    p = jax.nn.softmax(logits, axis=-1) * (adj > 0)
    p = p / jnp.sum(p, axis=-1, keepdims=True)
    return p @ x


def _ring_graph(n):
    """Directed ring both ways + self-loops (every target has >= 1 neighbor)."""
    src = jnp.arange(n, dtype=jnp.int32)
    return jnp.stack(
        [jnp.concatenate([(src + 1) % n, src, src]),
         jnp.concatenate([src, (src + 1) % n, src])],
        axis=0,
    )  # [2, 3n]


if __name__ == "__main__":
    key = jax.random.PRNGKey(0)
    k_x, k_beta, k_x2 = jax.random.split(key, 3)

    # --- Small single-tile test: 8 nodes, 32-dim features ------------------------------
    N, F = 8, 32
    x = jax.random.normal(k_x, (N, F), dtype=jnp.float32)
    # Deterministic beta ~ Uniform(0, 1), matching AGNN.reset_parameters().
    beta = jax.random.uniform(k_beta, (1,), dtype=jnp.float32)[0]
    edge_index = _ring_graph(N)

    ref = agnn_reference(x, edge_index, beta)

    # Default path: bf16 MXU operands, f32 accumulation / softmax.
    out = jax.block_until_ready(agnn_forward(x, edge_index, beta))
    assert out.shape == (N, F) and out.dtype == x.dtype
    assert jnp.allclose(out, ref, atol=5e-2, rtol=5e-2)

    # f32-operand path (tighter tolerance; Newton-refined reciprocal at finalize).
    out_f32 = jax.block_until_ready(
        agnn_forward(x, edge_index, beta, mxu_dtype=jnp.float32))
    assert jnp.allclose(out_f32, ref, atol=1e-3, rtol=1e-3)

    # --- Multi-tile test: exercises k-accumulation, empty-tile skip, source padding ----
    N2, F2 = 160, 24
    x2 = jax.random.normal(k_x2, (N2, F2), dtype=jnp.float32)
    edge_index2 = _ring_graph(N2)
    ref2 = agnn_reference(x2, edge_index2, beta)
    out2 = jax.block_until_ready(
        agnn_forward(x2, edge_index2, beta, tile_m=32, tile_n=128))
    assert out2.shape == (N2, F2)
    assert jnp.allclose(out2, ref2, atol=5e-2, rtol=5e-2)

    print("KERNEL_OK")
</pallas_src>

<mosaic_0001>
module attributes {stable_mosaic.version = 11 : i64} {
  func.func @_agnn_kernel(%arg0: i32, %arg1: i32, %arg2: memref<1x1xi32, #tpu.memory_space<smem>>, %arg3: memref<32x128xbf16, #tpu.memory_space<vmem>>, %arg4: memref<128x128xbf16, #tpu.memory_space<vmem>>, %arg5: memref<128x128xbf16, #tpu.memory_space<vmem>>, %arg6: memref<32x128xi8, #tpu.memory_space<vmem>>, %arg7: memref<32x128xf32, #tpu.memory_space<vmem>>, %arg8: memref<32x128xf32, #tpu.memory_space<vmem>>) attributes {dimension_semantics = [#tpu.dimension_semantics<parallel>, #tpu.dimension_semantics<arbitrary>], iteration_bounds = array<i64: 1, 1>, scalar_prefetch = 1 : i64, scratch_operands = 1 : i64, tpu.core_type = #tpu.core_type<tc>, window_params = [{transform_indices = @transform_0, window_bounds = array<i64: 32, 128>}, {transform_indices = @transform_1, window_bounds = array<i64: 128, 128>}, {transform_indices = @transform_2, window_bounds = array<i64: 128, 128>}, {transform_indices = @transform_3, window_bounds = array<i64: 32, 128>}, {transform_indices = @transform_4, window_bounds = array<i64: 32, 128>}]} {
    %c0_i32 = arith.constant 0 : i32
    %0 = arith.cmpi eq, %arg1, %c0_i32 : i32
    %1 = arith.extui %0 : i1 to i32
    %c0_i32_0 = arith.constant 0 : i32
    %2 = arith.cmpi ne, %1, %c0_i32_0 : i32
    scf.if %2 {
      %cst = arith.constant 0.000000e+00 : f32
      %12 = vector.broadcast %cst : f32 to vector<32x128xf32>
      %c0 = arith.constant 0 : index
      %c0_5 = arith.constant 0 : index
      %13 = vector.load %arg8[%c0, %c0_5] : memref<32x128xf32, #tpu.memory_space<vmem>>, vector<32x128xf32>
      tpu.vector_store %arg8[%c0, %c0_5], %12 {strides = array<i32>} : memref<32x128xf32, #tpu.memory_space<vmem>>, vector<32x128xf32>,
    } else {
    }
    %3 = arith.index_cast %arg0 : i32 to index
    %4 = arith.index_cast %arg1 : i32 to index
    %5 = memref.load %arg2[%3, %4] : memref<1x1xi32, #tpu.memory_space<smem>>
    %c0_i32_1 = arith.constant 0 : i32
    %6 = arith.cmpi sgt, %5, %c0_i32_1 : i32
    %7 = arith.extui %6 : i1 to i32
    %c0_i32_2 = arith.constant 0 : i32
    %8 = arith.cmpi ne, %7, %c0_i32_2 : i32
    scf.if %8 {
      %c0 = arith.constant 0 : index
      %c0_5 = arith.constant 0 : index
      %12 = vector.load %arg3[%c0, %c0_5] : memref<32x128xbf16, #tpu.memory_space<vmem>>, vector<32x128xbf16>
      %c0_6 = arith.constant 0 : index
      %c0_7 = arith.constant 0 : index
      %13 = vector.load %arg4[%c0_6, %c0_7] : memref<128x128xbf16, #tpu.memory_space<vmem>>, vector<128x128xbf16>
      %cst = arith.constant dense<0.000000e+00> : vector<32x128xf32>
      %14 = tpu.matmul %12, %13, %cst {dimension_numbers = #tpu.dot_dimension_numbers<[1], [1], [0], [0], [0, 0, 1, 0], [], []>} : vector<32x128xbf16>, vector<128x128xbf16>, vector<32x128xf32> -> vector<32x128xf32>
      %15 = math.exp %14 : vector<32x128xf32>
      %c0_8 = arith.constant 0 : index
      %c0_9 = arith.constant 0 : index
      %16 = vector.load %arg6[%c0_8, %c0_9] : memref<32x128xi8, #tpu.memory_space<vmem>>, vector<32x128xi8>
      %17 = arith.sitofp %16 : vector<32x128xi8> to vector<32x128xf32>
      %18 = arith.mulf %15, %17 : vector<32x128xf32>
      %19 = arith.truncf %18 : vector<32x128xf32> to vector<32x128xbf16>
      %c0_10 = arith.constant 0 : index
      %c0_11 = arith.constant 0 : index
      %20 = vector.load %arg8[%c0_10, %c0_11] : memref<32x128xf32, #tpu.memory_space<vmem>>, vector<32x128xf32>
      %c0_12 = arith.constant 0 : index
      %c0_13 = arith.constant 0 : index
      %21 = vector.load %arg5[%c0_12, %c0_13] : memref<128x128xbf16, #tpu.memory_space<vmem>>, vector<128x128xbf16>
      %cst_14 = arith.constant dense<0.000000e+00> : vector<32x128xf32>
      %22 = tpu.matmul %19, %21, %cst_14 {dimension_numbers = #tpu.dot_dimension_numbers<[1], [0], [0], [1], [0, 0, 1, 1], [], []>} : vector<32x128xbf16>, vector<128x128xbf16>, vector<32x128xf32> -> vector<32x128xf32>
      %23 = arith.addf %20, %22 : vector<32x128xf32>
      %c0_15 = arith.constant 0 : index
      %c0_16 = arith.constant 0 : index
      %24 = vector.load %arg8[%c0_15, %c0_16] : memref<32x128xf32, #tpu.memory_space<vmem>>, vector<32x128xf32>
      tpu.vector_store %arg8[%c0_15, %c0_16], %23 {strides = array<i32>} : memref<32x128xf32, #tpu.memory_space<vmem>>, vector<32x128xf32>,
    } else {
    }
    %c0_i32_3 = arith.constant 0 : i32
    %9 = arith.cmpi eq, %arg1, %c0_i32_3 : i32
    %10 = arith.extui %9 : i1 to i32
    %c0_i32_4 = arith.constant 0 : i32
    %11 = arith.cmpi ne, %10, %c0_i32_4 : i32
    scf.if %11 {
      %c0 = arith.constant 0 : index
      %c0_5 = arith.constant 0 : index
      %12 = vector.load %arg8[%c0, %c0_5] : memref<32x128xf32, #tpu.memory_space<vmem>>, vector<32x128xf32>
      %13 = vector.extract_strided_slice %12 {offsets = [0, 0], sizes = [32, 1], strides = [1, 1]} : vector<32x128xf32> to vector<32x1xf32>
      %cst = arith.constant 0.000000e+00 : f32
      %14 = vector.broadcast %cst : f32 to vector<32x1xf32>
      %15 = arith.cmpf ogt, %13, %14 : vector<32x1xf32>
      %16 = tpu.reciprocal %13 {approx = true} : vector<32x1xf32> -> vector<32x1xf32>
      %17 = arith.mulf %13, %16 : vector<32x1xf32>
      %cst_6 = arith.constant 2.000000e+00 : f32
      %18 = vector.broadcast %cst_6 : f32 to vector<32x1xf32>
      %19 = arith.subf %18, %17 : vector<32x1xf32>
      %20 = arith.mulf %16, %19 : vector<32x1xf32>
      %21 = vector.broadcast %20 : vector<32x1xf32> to vector<32x128xf32>
      %22 = arith.mulf %12, %21 : vector<32x128xf32>
      %cst_7 = arith.constant 0.000000e+00 : f32
      %23 = vector.shape_cast %15 : vector<32x1xi1> to vector<32x1xi1>
      %24 = vector.broadcast %23 : vector<32x1xi1> to vector<32x128xi1>
      %25 = vector.broadcast %cst_7 : f32 to vector<32x128xf32>
      %26 = arith.select %24, %22, %25 : vector<32x128xi1>, vector<32x128xf32>
      %c0_8 = arith.constant 0 : index
      %c0_9 = arith.constant 0 : index
      %27 = vector.load %arg7[%c0_8, %c0_9] : memref<32x128xf32, #tpu.memory_space<vmem>>, vector<32x128xf32>
      tpu.vector_store %arg7[%c0_8, %c0_9], %26 {strides = array<i32>} : memref<32x128xf32, #tpu.memory_space<vmem>>, vector<32x128xf32>,
    } else {
    }
    return
  }
  func.func @transform_0(%arg0: i32, %arg1: i32, %arg2: memref<1x1xi32, #tpu.memory_space<smem>>) -> (i32, i32) {
    %c0_i32 = arith.constant 0 : i32
    %c0_i32_0 = arith.constant 0 : i32
    return %arg0, %c0_i32 : i32, i32
  }
  func.func @transform_1(%arg0: i32, %arg1: i32, %arg2: memref<1x1xi32, #tpu.memory_space<smem>>) -> (i32, i32) {
    %c0_i32 = arith.constant 0 : i32
    %c0_i32_0 = arith.constant 0 : i32
    return %arg1, %c0_i32 : i32, i32
  }
  func.func @transform_2(%arg0: i32, %arg1: i32, %arg2: memref<1x1xi32, #tpu.memory_space<smem>>) -> (i32, i32) {
    %c0_i32 = arith.constant 0 : i32
    %c0_i32_0 = arith.constant 0 : i32
    return %arg1, %c0_i32 : i32, i32
  }
  func.func @transform_3(%arg0: i32, %arg1: i32, %arg2: memref<1x1xi32, #tpu.memory_space<smem>>) -> (i32, i32) {
    %c0_i32 = arith.constant 0 : i32
    return %arg0, %arg1 : i32, i32
  }
  func.func @transform_4(%arg0: i32, %arg1: i32, %arg2: memref<1x1xi32, #tpu.memory_space<smem>>) -> (i32, i32) {
    %c0_i32 = arith.constant 0 : i32
    %c0_i32_0 = arith.constant 0 : i32
    return %arg0, %c0_i32 : i32, i32
  }
}

</mosaic_0001>

<llo_original>
// kernel: tpu_custom_call.1
$region0: #{tpu_custom_call.1}
  #allocation0 [shape = 'u32[]', space=smem, size = 0x4, offset = 0x4, fixed_abs, tag = 'smem constant byte address 0x4 - core index']
  #allocation1 [shape = 'u32[144,128]{1,0:T(1,128)}', space=vmem, size = 0x12000, scoped, tag = 'internal scratch']
  #allocation2 [shape = 'f32[32,128]{1,0:T(8,128)}', space=vmem, size = 0x4000, scoped, tag = 'scratch operand']
  #allocation3 [shape = 's32[1]{0}', space=sflag, size = 0x4, scoped, tag = 'scoped memory for tpu_custom_call.1']
  #allocation4 [shape = 's32[1,1]{1,0:T(1,128)S(6)}', space=smem, size = 0x200, scoped, tag = 'prefetched SMEM operand 0']
  %s0 = inlined_call_operand.<no memory space> [shape: s32[1,1], index: 0, kind: input, shape index: {}]
  %s1 = inlined_call_operand.hbm [shape: bf16[32,128], index: 1, kind: input, shape index: {}]
  %s2 = inlined_call_operand.hbm [shape: bf16[128,128], index: 2, kind: input, shape index: {}]
  %s3 = inlined_call_operand.hbm [shape: bf16[128,128], index: 3, kind: input, shape index: {}]
  %s4 = inlined_call_operand.vmem [shape: s8[32,128], index: 4, kind: input, shape index: {}]
  %s5 = inlined_call_operand.hbm [shape: f32[32,128], index: 5, kind: output, shape index: {}]
  %s6 = sld [smem:[#allocation0]]
  $region50: #{tpu_custom_call.1} parent=0
    _
  %s8 = ssub.s32 1, %s6
  %s9 = scalar_select 0, %s8, %s6
  %10 = sst [smem:[#allocation4]] %s0
  $region1: #{tpu_custom_call.1} parent=0
    #allocation5 [shape = 'u8[8192]{0}', space=vmem, size = 0x2000, scoped, tag = 'input window, operand 1, single buffered']
    #allocation6 [shape = 's32[1]{0}', space=sflag, size = 0x4, scoped, tag = 'scoped memory for tpu_custom_call.1']
    #allocation7 [shape = 's32[1]{0}', space=sflag, size = 0x4, scoped, tag = 'scoped memory for tpu_custom_call.1']
    #allocation8 [shape = 'u8[32768]{0}', space=vmem, size = 0x8000, scoped, tag = 'input window, operand 2, single buffered']
    #allocation9 [shape = 's32[1]{0}', space=sflag, size = 0x4, scoped, tag = 'scoped memory for tpu_custom_call.1']
    #allocation10 [shape = 'u8[32768]{0}', space=vmem, size = 0x8000, scoped, tag = 'input window, operand 3, single buffered']
    #allocation11 [shape = 'u8[16384]{0}', space=vmem, size = 0x4000, scoped, tag = 'output window, operand 0, single buffered']
    %11 = vsyncpa [#allocation6], 0
    %12 = vsyncpa [#allocation9], 0
    %13 = vsyncpa [#allocation7], 0
    // Predicated region
    $region2: #{tpu_custom_call.1} parent=1 // pred_check
      _
    $region3: #{tpu_custom_call.1} parent=1 // pred_check_branch
      %15 = sbr.rel (0) target = $region5
    $region4: #{tpu_custom_call.1} parent=1 // pred_region
      %s17 = ssub.s32 256, 256
      %18 = vsyncadd [#allocation6], %s17
      %s19 = sshll.u32 [#allocation5], 4
      %s20 = int_to_ptr.vmem [resolvable:$true] %s19
      %25 = dma.hbm_to_vmem [thread:$0]  %s1, 256, %s20, [#allocation6], 64, 64, 4
    $region5: #{tpu_custom_call.1} parent=1 // pred_fallthru
      _
    // Predicated region
    $region6: #{tpu_custom_call.1} parent=1 // pred_check
      _
    $region7: #{tpu_custom_call.1} parent=1 // pred_check_branch
      %27 = sbr.rel (0) target = $region9
    $region8: #{tpu_custom_call.1} parent=1 // pred_region
      %s29 = ssub.s32 1024, 1024
      %30 = vsyncadd [#allocation9], %s29
      %s31 = sshll.u32 [#allocation8], 4
      %s32 = int_to_ptr.vmem [resolvable:$true] %s31
      %37 = dma.hbm_to_vmem [thread:$0]  %s2, 1024, %s32, [#allocation9], 64, 64, 4
    $region9: #{tpu_custom_call.1} parent=1 // pred_fallthru
      _
    // Predicated region
    $region10: #{tpu_custom_call.1} parent=1 // pred_check
      _
    $region11: #{tpu_custom_call.1} parent=1 // pred_check_branch
      %39 = sbr.rel (0) target = $region13
    $region12: #{tpu_custom_call.1} parent=1 // pred_region
      %s41 = ssub.s32 1024, 1024
      %42 = vsyncadd [#allocation9], %s41
      %s43 = sshll.u32 [#allocation10], 4
      %s44 = int_to_ptr.vmem [resolvable:$true] %s43
      %49 = dma.hbm_to_vmem [thread:$0]  %s3, 1024, %s44, [#allocation9], 64, 64, 4
    $region13: #{tpu_custom_call.1} parent=1 // pred_fallthru
      _
    // Predicated region
    $region14: #{tpu_custom_call.1} parent=1 // pred_check
      _
    $region15: #{tpu_custom_call.1} parent=1 // pred_check_branch
      %51 = sbr.rel (0) target = $region17
    $region16: #{tpu_custom_call.1} parent=1 // pred_region
      _
    $region17: #{tpu_custom_call.1} parent=1 // pred_fallthru
      _
    // Predicated region
    $region18: #{tpu_custom_call.1} parent=1 // pred_check
      _
    $region19: #{tpu_custom_call.1} parent=1 // pred_check_branch
      %53 = sbr.rel (0) target = $region21
    $region20: #{tpu_custom_call.1} parent=1 // pred_region
      %54 = dma.done [#allocation6], 256
    $region21: #{tpu_custom_call.1} parent=1 // pred_fallthru
      _
    // Predicated region
    $region22: #{tpu_custom_call.1} parent=1 // pred_check
      _
    $region23: #{tpu_custom_call.1} parent=1 // pred_check_branch
      %56 = sbr.rel (0) target = $region25
    $region24: #{tpu_custom_call.1} parent=1 // pred_region
      %57 = dma.done [#allocation9], 1024
    $region25: #{tpu_custom_call.1} parent=1 // pred_fallthru
      _
    // Predicated region
    $region26: #{tpu_custom_call.1} parent=1 // pred_check
      _
    $region27: #{tpu_custom_call.1} parent=1 // pred_check_branch
      %59 = sbr.rel (0) target = $region29
    $region28: #{tpu_custom_call.1} parent=1 // pred_region
      %60 = dma.done [#allocation9], 1024
    $region29: #{tpu_custom_call.1} parent=1 // pred_fallthru
      _
    %p62 = scmp.eq.s32.totalorder 0, 0
    // Predicated region
    $region30: #{tpu_custom_call.1} parent=1 // pred_check
      %p63 = pneg %p62
    $region31: #{tpu_custom_call.1} parent=1 // pred_check_branch
      %65 = sbr.rel (%p63) target = $region33
    $region32: #{tpu_custom_call.1} parent=1 // pred_region
      %66 = vst [vmem:[#allocation2] sm:$0xff] 0.0
      %67 = vst [vmem:[#allocation2 + $0x8] sm:$0xff] 0.0
      %68 = vst [vmem:[#allocation2 + $0x10] sm:$0xff] 0.0
      %69 = vst [vmem:[#allocation2 + $0x18] sm:$0xff] 0.0
    $region33: #{tpu_custom_call.1} parent=1 // pred_fallthru
      _
    %s70 = sadd.s32 0, 0
    %s71 = smul.u32 %s70, 128
    %s72 = sadd.s32 %s71, 0
    %s73 = sld [smem:[#allocation4 + %s72]]
    %p74 = scmp.gt.s32.totalorder %s73, 0
    // Predicated region
    $region34: #{tpu_custom_call.1} parent=1 // pred_check
      %p75 = pneg %p74
    $region35: #{tpu_custom_call.1} parent=1 // pred_check_branch
      %77 = sbr.rel (%p75) target = $region37
    $region36: #{tpu_custom_call.1} parent=1 // pred_region
      %v78 = vld [vmem:[#allocation5] sm:$0xf]
      %v79 = vld [vmem:[#allocation5 + $0x4] sm:$0xf]
      %v80 = vld [vmem:[#allocation5 + $0x8] sm:$0xf]
      %v81 = vld [vmem:[#allocation5 + $0xc] sm:$0xf]
      %v82 = vld [vmem:[#allocation8] sm:$0xf]
      %v83 = vld [vmem:[#allocation8 + $0x4] sm:$0xf]
      %v84 = vld [vmem:[#allocation8 + $0x8] sm:$0xf]
      %v85 = vld [vmem:[#allocation8 + $0xc] sm:$0xf]
      %v86 = vld [vmem:[#allocation8 + $0x10] sm:$0xf]
      %v87 = vld [vmem:[#allocation8 + $0x14] sm:$0xf]
      %v88 = vld [vmem:[#allocation8 + $0x18] sm:$0xf]
      %v89 = vld [vmem:[#allocation8 + $0x1c] sm:$0xf]
      %v90 = vld [vmem:[#allocation8 + $0x20] sm:$0xf]
      %v91 = vld [vmem:[#allocation8 + $0x24] sm:$0xf]
      %v92 = vld [vmem:[#allocation8 + $0x28] sm:$0xf]
      %v93 = vld [vmem:[#allocation8 + $0x2c] sm:$0xf]
      %v94 = vld [vmem:[#allocation8 + $0x30] sm:$0xf]
      %v95 = vld [vmem:[#allocation8 + $0x34] sm:$0xf]
      %v96 = vld [vmem:[#allocation8 + $0x38] sm:$0xf]
      %v97 = vld [vmem:[#allocation8 + $0x3c] sm:$0xf]
      %v102 = vunpack.c.l.b16 %v78
      %v103 = vunpack.c.l.b16 %v79
      %v104 = vunpack.c.l.b16 %v80
      %v105 = vunpack.c.l.b16 %v81
      %v106 = vpack.c.b16 %v103, %v102
      %v107 = vpack.c.b16 %v105, %v104
      %v126 = vunpack.c.l.b16 %v82
      %v127 = vunpack.c.l.b16 %v83
      %v128 = vunpack.c.l.b16 %v84
      %v129 = vunpack.c.l.b16 %v85
      %v130 = vunpack.c.l.b16 %v86
      %v131 = vunpack.c.l.b16 %v87
      %v132 = vunpack.c.l.b16 %v88
      %v133 = vunpack.c.l.b16 %v89
      %v134 = vunpack.c.l.b16 %v90
      %v135 = vunpack.c.l.b16 %v91
      %v136 = vunpack.c.l.b16 %v92
      %v137 = vunpack.c.l.b16 %v93
      %v138 = vunpack.c.l.b16 %v94
      %v139 = vunpack.c.l.b16 %v95
      %v140 = vunpack.c.l.b16 %v96
      %v141 = vunpack.c.l.b16 %v97
      %v142 = vpack.c.b16 %v127, %v126
      %v143 = vpack.c.b16 %v129, %v128
      %v144 = vpack.c.b16 %v131, %v130
      %v145 = vpack.c.b16 %v133, %v132
      %v146 = vpack.c.b16 %v135, %v134
      %v147 = vpack.c.b16 %v137, %v136
      %v148 = vpack.c.b16 %v139, %v138
      %v149 = vpack.c.b16 %v141, %v140
      %158 = vmatprep.subr.bf16.mxu0 0
      %159 = vmatpush1.bf16.xpose.msra.mxu0 %v142
      %160 = vmatprep.subr.bf16.mxu0 0
      %161 = vmatpush1.bf16.xpose.msra.mxu0 %v143
      %162 = vmatprep.subr.bf16.mxu0 0
      %163 = vmatpush1.bf16.xpose.msra.mxu0 %v144
      %164 = vmatprep.subr.bf16.mxu0 0
      %165 = vmatpush1.bf16.xpose.msra.mxu0 %v145
      %166 = vmatprep.subr.bf16.mxu0 0
      %167 = vmatpush1.bf16.xpose.msra.mxu0 %v146
      %168 = vmatprep.subr.bf16.mxu0 0
      %169 = vmatpush1.bf16.xpose.msra.mxu0 %v147
      %170 = vmatprep.subr.bf16.mxu0 0
      %171 = vmatpush1.bf16.xpose.msra.mxu0 %v148
      %172 = vmatprep.subr.bf16.mxu0 0
      %173 = vmatpush1.bf16.xpose.msra.mxu0 %v149
      %174 = vmatprep.subr.bf16.mxu0 0
      %175 = vmatpush1.bf16.xpose.msra.mxu0 0
      %176 = vmatprep.subr.bf16.mxu0 0
      %177 = vmatpush1.bf16.xpose.msra.mxu0 0
      %178 = vmatprep.subr.bf16.mxu0 0
      %179 = vmatpush1.bf16.xpose.msra.mxu0 0
      %180 = vmatprep.subr.bf16.mxu0 0
      %181 = vmatpush1.bf16.xpose.msra.mxu0 0
      %182 = vmatprep.subr.bf16.mxu0 0
      %183 = vmatpush1.bf16.xpose.msra.mxu0 0
      %184 = vmatprep.subr.bf16.mxu0 0
      %185 = vmatpush1.bf16.xpose.msra.mxu0 0
      %186 = vmatprep.subr.bf16.mxu0 0
      %187 = vmatpush1.bf16.xpose.msra.mxu0 0
      %188 = vmatprep.subr.bf16.mxu0 0
      %189 = vmatpush1.bf16.xpose.msra.mxu0 0
      %190 = vmatprep.mubr.bf16.mxu0 0
      %191 = vmatmul.mubr.bf16.gmra.mrb[0].mxu0 %v106
      %v192 = vpop.f32.mrb[0].mxu0
      %v193 = vadd.f32 0.0, %v192
      %v194 = vpop.f32.mrb[0].mxu0
      %v195 = vpop.f32.mrb[0].mxu0
      %v196 = vadd.f32 0.0, %v195
      %v197 = vpop.f32.mrb[0].mxu0
      %198 = vmatprep.mubr.bf16.mxu0 0
      %199 = vmatmul.mubr.bf16.gmra.mrb[0].mxu0 %v107
      %v200 = vpop.f32.mrb[0].mxu0
      %v201 = vadd.f32 0.0, %v200
      %v202 = vpop.f32.mrb[0].mxu0
      %v203 = vpop.f32.mrb[0].mxu0
      %v204 = vadd.f32 0.0, %v203
      %v205 = vpop.f32.mrb[0].mxu0
      %206 = vdwg.mxu0
      %v207 = vmul.f32 %v193, 1.442695
      %v208 = vpow.pop %v207
      %v209 = vmul.f32 %v196, 1.442695
      %v210 = vpow.pop %v209
      %v211 = vmul.f32 %v201, 1.442695
      %v212 = vpow.pop %v211
      %v213 = vmul.f32 %v204, 1.442695
      %v214 = vpow.pop %v213
      %v215 = vld [vmem:[%s4] sm:$0xff]
      %v216 = vunpack.c.0.s8 %v215
      %v217 = vunpack.c.1.s8 %v215
      %v218 = vunpack.c.2.s8 %v215
      %v219 = vunpack.c.3.s8 %v215
      %v220 = vcvt.s32.f32 %v216
      %v221 = vcvt.s32.f32 %v217
      %v222 = vcvt.s32.f32 %v218
      %v223 = vcvt.s32.f32 %v219
      %v224 = vmul.f32 %v208, %v220
      %v225 = vmul.f32 %v210, %v221
      %v226 = vmul.f32 %v212, %v222
      %v227 = vmul.f32 %v214, %v223
      %v228 = vpack.c.bf16 %v225, %v224
      %v229 = vpack.c.bf16 %v227, %v226
      %v230 = vld [vmem:[#allocation2] sm:$0xff]
      %v231 = vld [vmem:[#allocation2 + $0x8] sm:$0xff]
      %v232 = vld [vmem:[#allocation2 + $0x10] sm:$0xff]
      %v233 = vld [vmem:[#allocation2 + $0x18] sm:$0xff]
      %v234 = vld [vmem:[#allocation10] sm:$0xf]
      %v235 = vld [vmem:[#allocation10 + $0x4] sm:$0xf]
      %v236 = vld [vmem:[#allocation10 + $0x8] sm:$0xf]
      %v237 = vld [vmem:[#allocation10 + $0xc] sm:$0xf]
      %v238 = vld [vmem:[#allocation10 + $0x10] sm:$0xf]
      %v239 = vld [vmem:[#allocation10 + $0x14] sm:$0xf]
      %v240 = vld [vmem:[#allocation10 + $0x18] sm:$0xf]
      %v241 = vld [vmem:[#allocation10 + $0x1c] sm:$0xf]
      %v242 = vld [vmem:[#allocation10 + $0x20] sm:$0xf]
      %v243 = vld [vmem:[#allocation10 + $0x24] sm:$0xf]
      %v244 = vld [vmem:[#allocation10 + $0x28] sm:$0xf]
      %v245 = vld [vmem:[#allocation10 + $0x2c] sm:$0xf]
      %v246 = vld [vmem:[#allocation10 + $0x30] sm:$0xf]
      %v247 = vld [vmem:[#allocation10 + $0x34] sm:$0xf]
      %v248 = vld [vmem:[#allocation10 + $0x38] sm:$0xf]
      %v249 = vld [vmem:[#allocation10 + $0x3c] sm:$0xf]
      %v266 = vunpack.c.l.b16 %v234
      %v267 = vunpack.c.l.b16 %v235
      %v268 = vunpack.c.l.b16 %v236
      %v269 = vunpack.c.l.b16 %v237
      %v270 = vunpack.c.l.b16 %v238
      %v271 = vunpack.c.l.b16 %v239
      %v272 = vunpack.c.l.b16 %v240
      %v273 = vunpack.c.l.b16 %v241
      %v274 = vunpack.c.l.b16 %v242
      %v275 = vunpack.c.l.b16 %v243
      %v276 = vunpack.c.l.b16 %v244
      %v277 = vunpack.c.l.b16 %v245
      %v278 = vunpack.c.l.b16 %v246
      %v279 = vunpack.c.l.b16 %v247
      %v280 = vunpack.c.l.b16 %v248
      %v281 = vunpack.c.l.b16 %v249
      %v282 = vpack.c.b16 %v267, %v266
      %v283 = vpack.c.b16 %v269, %v268
      %v284 = vpack.c.b16 %v271, %v270
      %v285 = vpack.c.b16 %v273, %v272
      %v286 = vpack.c.b16 %v275, %v274
      %v287 = vpack.c.b16 %v277, %v276
      %v288 = vpack.c.b16 %v279, %v278
      %v289 = vpack.c.b16 %v281, %v280
      %298 = vmatprep.subr.bf16.mxu0 0
      %299 = vmatpush1.bf16.msra.mxu0 %v282
      %300 = vmatprep.subr.bf16.mxu0 0
      %301 = vmatpush1.bf16.msra.mxu0 %v283
      %302 = vmatprep.subr.bf16.mxu0 0
      %303 = vmatpush1.bf16.msra.mxu0 %v284
      %304 = vmatprep.subr.bf16.mxu0 0
      %305 = vmatpush1.bf16.msra.mxu0 %v285
      %306 = vmatprep.subr.bf16.mxu0 0
      %307 = vmatpush1.bf16.msra.mxu0 %v286
      %308 = vmatprep.subr.bf16.mxu0 0
      %309 = vmatpush1.bf16.msra.mxu0 %v287
      %310 = vmatprep.subr.bf16.mxu0 0
      %311 = vmatpush1.bf16.msra.mxu0 %v288
      %312 = vmatprep.subr.bf16.mxu0 0
      %313 = vmatpush1.bf16.msra.mxu0 %v289
      %314 = vmatprep.subr.bf16.mxu0 0
      %315 = vmatpush1.bf16.msra.mxu0 0
      %316 = vmatprep.subr.bf16.mxu0 0
      %317 = vmatpush1.bf16.msra.mxu0 0
      %318 = vmatprep.subr.bf16.mxu0 0
      %319 = vmatpush1.bf16.msra.mxu0 0
      %320 = vmatprep.subr.bf16.mxu0 0
      %321 = vmatpush1.bf16.msra.mxu0 0
      %322 = vmatprep.subr.bf16.mxu0 0
      %323 = vmatpush1.bf16.msra.mxu0 0
      %324 = vmatprep.subr.bf16.mxu0 0
      %325 = vmatpush1.bf16.msra.mxu0 0
      %326 = vmatprep.subr.bf16.mxu0 0
      %327 = vmatpush1.bf16.msra.mxu0 0
      %328 = vmatprep.subr.bf16.mxu0 0
      %329 = vmatpush1.bf16.msra.mxu0 0
      %330 = vmatprep.mubr.bf16.mxu0 0
      %331 = vmatmul.mubr.bf16.gmra.mrb[0].mxu0 %v228
      %v332 = vpop.f32.mrb[0].mxu0
      %v333 = vadd.f32 0.0, %v332
      %v334 = vpop.f32.mrb[0].mxu0
      %v335 = vpop.f32.mrb[0].mxu0
      %v336 = vadd.f32 0.0, %v335
      %v337 = vpop.f32.mrb[0].mxu0
      %338 = vmatprep.mubr.bf16.mxu0 0
      %339 = vmatmul.mubr.bf16.gmra.mrb[0].mxu0 %v229
      %v340 = vpop.f32.mrb[0].mxu0
      %v341 = vadd.f32 0.0, %v340
      %v342 = vpop.f32.mrb[0].mxu0
      %v343 = vpop.f32.mrb[0].mxu0
      %v344 = vadd.f32 0.0, %v343
      %v345 = vpop.f32.mrb[0].mxu0
      %346 = vdwg.mxu0
      %v347 = vadd.f32 %v230, %v333
      %v348 = vadd.f32 %v231, %v336
      %v349 = vadd.f32 %v232, %v341
      %v350 = vadd.f32 %v233, %v344
      %351 = vst [vmem:[#allocation2] sm:$0xff] %v347
      %352 = vst [vmem:[#allocation2 + $0x8] sm:$0xff] %v348
      %353 = vst [vmem:[#allocation2 + $0x10] sm:$0xff] %v349
      %354 = vst [vmem:[#allocation2 + $0x18] sm:$0xff] %v350
    $region37: #{tpu_custom_call.1} parent=1 // pred_fallthru
      _
    // Predicated region
    $region38: #{tpu_custom_call.1} parent=1 // pred_check
      %p355 = pneg %p62
    $region39: #{tpu_custom_call.1} parent=1 // pred_check_branch
      %357 = sbr.rel (%p355) target = $region41
    $region40: #{tpu_custom_call.1} parent=1 // pred_region
      %v358 = vld [vmem:[#allocation2] sm:$0xff]
      %v359 = vld [vmem:[#allocation2 + $0x8] sm:$0xff]
      %v360 = vld [vmem:[#allocation2 + $0x10] sm:$0xff]
      %v361 = vld [vmem:[#allocation2 + $0x18] sm:$0xff]
      %vm362 = vcmp.gt.f32.partialorder %v358, 0.0
      %vm363 = vcmp.gt.f32.partialorder %v359, 0.0
      %vm364 = vcmp.gt.f32.partialorder %v360, 0.0
      %vm365 = vcmp.gt.f32.partialorder %v361, 0.0
      %v366 = vrcp.pop %v358
      %v367 = vrcp.pop %v359
      %v368 = vrcp.pop %v360
      %v369 = vrcp.pop %v361
      %v370 = vmul.f32 %v358, %v366
      %v371 = vmul.f32 %v359, %v367
      %v372 = vmul.f32 %v360, %v368
      %v373 = vmul.f32 %v361, %v369
      %v374 = vsub.f32 2.0, %v370
      %v375 = vsub.f32 2.0, %v371
      %v376 = vsub.f32 2.0, %v372
      %v377 = vsub.f32 2.0, %v373
      %v378 = vmul.f32 %v366, %v374
      %v379 = vmul.f32 %v367, %v375
      %v380 = vmul.f32 %v368, %v376
      %v381 = vmul.f32 %v369, %v377
      %383 = vset.pattern.permute.xlu0 0
      %384 = vperm.xlu0 %383, %v378
      %v385 = vpop.permute.xlu0 %384
      %388 = vset.pattern.permute.xlu0 0
      %389 = vperm.xlu0 %388, %v379
      %v390 = vpop.permute.xlu0 %389
      %393 = vset.pattern.permute.xlu0 0
      %394 = vperm.xlu0 %393, %v380
      %v395 = vpop.permute.xlu0 %394
      %398 = vset.pattern.permute.xlu0 0
      %399 = vperm.xlu0 %398, %v381
      %v400 = vpop.permute.xlu0 %399
      %v402 = vmul.f32 %v358, %v385
      %v403 = vmul.f32 %v359, %v390
      %v404 = vmul.f32 %v360, %v395
      %v405 = vmul.f32 %v361, %v400
      %v406 = vsel %vm362, 1, 0
      %v407 = vsel %vm363, 1, 0
      %v408 = vsel %vm364, 1, 0
      %v409 = vsel %vm365, 1, 0
      %410 = vset.pattern.permute.xlu0 0
      %411 = vperm.xlu0 %410, %v406
      %v412 = vpop.permute.xlu0 %411
      %413 = vset.pattern.permute.xlu0 0
      %414 = vperm.xlu0 %413, %v407
      %v415 = vpop.permute.xlu0 %414
      %416 = vset.pattern.permute.xlu0 0
      %417 = vperm.xlu0 %416, %v408
      %v418 = vpop.permute.xlu0 %417
      %419 = vset.pattern.permute.xlu0 0
      %420 = vperm.xlu0 %419, %v409
      %v421 = vpop.permute.xlu0 %420
      %vm422 = vcmp.eq.s32.totalorder %v412, 1
      %vm423 = vcmp.eq.s32.totalorder %v415, 1
      %vm424 = vcmp.eq.s32.totalorder %v418, 1
      %vm425 = vcmp.eq.s32.totalorder %v421, 1
      %v426 = vsel %vm422, %v402, 0.0
      %v427 = vsel %vm423, %v403, 0.0
      %v428 = vsel %vm424, %v404, 0.0
      %v429 = vsel %vm425, %v405, 0.0
      %430 = vst [vmem:[#allocation11] sm:$0xff] %v426
      %431 = vst [vmem:[#allocation11 + $0x8] sm:$0xff] %v427
      %432 = vst [vmem:[#allocation11 + $0x10] sm:$0xff] %v428
      %433 = vst [vmem:[#allocation11 + $0x18] sm:$0xff] %v429
    $region41: #{tpu_custom_call.1} parent=1 // pred_fallthru
      _
    // Predicated region
    $region42: #{tpu_custom_call.1} parent=1 // pred_check
      _
    $region43: #{tpu_custom_call.1} parent=1 // pred_check_branch
      %435 = sbr.rel (0) target = $region45
    $region44: #{tpu_custom_call.1} parent=1 // pred_region
      %s437 = ssub.s32 512, 512
      %438 = vsyncadd [#allocation7], %s437
      %s439 = sshll.u32 [#allocation11], 4
      %s440 = int_to_ptr.vmem [resolvable:$true] %s439
      %445 = dma.vmem_to_hbm [thread:$0]  %s440, 512, %s5, [#allocation7], 128, 128, 8
    $region45: #{tpu_custom_call.1} parent=1 // pred_fallthru
      _
    // Predicated region
    $region46: #{tpu_custom_call.1} parent=1 // pred_check
      _
    $region47: #{tpu_custom_call.1} parent=1 // pred_check_branch
      %447 = sbr.rel (0) target = $region49
    $region48: #{tpu_custom_call.1} parent=1 // pred_region
      %448 = dma.done [#allocation7], 512
    $region49: #{tpu_custom_call.1} parent=1 // pred_fallthru
      _
    %449 = vsyncpa [#allocation6], 1
    %450 = vsyncpa [#allocation9], 1
    %451 = vsyncpa [#allocation7], 1

</llo_original>
